<compile_context>
chip_gen: v6e
topology: v6e:2x2x1
jax: 0.10.0
libtpu: 0.0.40
codegen_flags: <defaults>
</compile_context>

<pallas_src>
import functools

import jax
import jax.numpy as jnp
from jax.experimental import pallas as pl
from jax.experimental.pallas import tpu as pltpu

_LANES = 128
_MAX_BLOCK_ROWS = 4096           # (4096, 128) f32 tile = 2 MiB per input per buffer
_VMEM_LIMIT_BYTES = 32 * 1024 * 1024
_SMALL_INPUT_THRESHOLD = 262144  # below this, pure XLA beats the kernel launch


def _iou_sums_kernel(x_ref, t_ref, out_ref, acc_ref, *,
                     block_rows, blocks_per_split, total_rows, has_ragged):
    """Streams tiles and accumulates sum(sigmoid(x)*t) and sum(sigmoid(x)+t).

    acc_ref: VMEM (2, 8, 128) f32 vreg-sized accumulator.
    out_ref: (1, 2, 8, 128) per-split partials; final reduction in the wrapper.
    """
    p = pl.program_id(0)          # split / megacore axis ("parallel")
    i = pl.program_id(1)          # streaming axis ("arbitrary")

    @pl.when(i == 0)
    def _init():
        acc_ref[...] = jnp.zeros_like(acc_ref)

    x = x_ref[...].astype(jnp.float32)
    t = t_ref[...].astype(jnp.float32)
    # sigmoid(x) = 0.5 * (tanh(0.5*x) + 1): a single EUP push per vreg.
    s = 0.5 * (jnp.tanh(0.5 * x) + 1.0)

    groups = block_rows // 8

    def accumulate(sv, tv):
        # In-register tree reduction of the whole tile down to one vreg each,
        # then a single read-modify-write of the tiny accumulator.
        inter = jnp.sum((sv * tv).reshape(groups, 8, _LANES), axis=0)
        total = jnp.sum((sv + tv).reshape(groups, 8, _LANES), axis=0)
        acc_ref[0] += inter
        acc_ref[1] += total

    if not has_ragged:
        # Exact tiling: single straight-line hot path, no predicates.
        accumulate(s, t)
    else:
        # Only boundary / phantom blocks take the masked path.  Mask uses a
        # block-local row index (int32-safe for any tensor size).
        row_start = (p * blocks_per_split + i) * block_rows
        is_full = row_start + block_rows <= total_rows

        @pl.when(is_full)
        def _full():
            accumulate(s, t)

        @pl.when(jnp.logical_not(is_full))
        def _ragged():
            valid_rows = total_rows - row_start   # <= 0 for phantom blocks
            row_idx = jax.lax.broadcasted_iota(jnp.int32, s.shape, 0)
            keep = row_idx < valid_rows
            # Mask s AND t before any arithmetic so garbage (NaN/Inf) from the
            # out-of-bounds rows never reaches the accumulator.
            accumulate(jnp.where(keep, s, 0.0), jnp.where(keep, t, 0.0))

    @pl.when(i == pl.num_programs(1) - 1)
    def _finalize():
        out_ref[0] = acc_ref[...]


def _iou_partial_sums(x2d, t2d):
    """Runs the streaming kernel on a (rows, 128) layout; returns (I, T)."""
    rows = x2d.shape[0]
    block_rows = max(8, (min(rows, _MAX_BLOCK_ROWS) // 8) * 8)
    total_blocks = pl.cdiv(rows, block_rows)

    # Unconditional 2-way split so v7x megacore can use both TensorCores; on
    # 1-TC chips (v5e/v6e) the extra axis is just a sequential loop.
    num_splits = 2 if total_blocks >= 2 else 1
    blocks_per_split = pl.cdiv(total_blocks, num_splits)
    has_phantom = num_splits * blocks_per_split != total_blocks
    has_ragged = (rows % block_rows != 0) or has_phantom

    kernel = functools.partial(
        _iou_sums_kernel,
        block_rows=block_rows,
        blocks_per_split=blocks_per_split,
        total_rows=rows,
        has_ragged=has_ragged,
    )

    def in_map(p, i):
        gb = p * blocks_per_split + i
        if has_phantom:
            # Clamp so the (masked-to-zero) phantom block never DMAs past the
            # end of the array.
            gb = jnp.minimum(gb, total_blocks - 1)
        return (gb, 0)

    in_spec = pl.BlockSpec((block_rows, _LANES), in_map)

    partials = pl.pallas_call(
        kernel,
        out_shape=jax.ShapeDtypeStruct((num_splits, 2, 8, _LANES), jnp.float32),
        grid_spec=pltpu.PrefetchScalarGridSpec(
            num_scalar_prefetch=0,
            grid=(num_splits, blocks_per_split),
            in_specs=[in_spec, in_spec],
            out_specs=pl.BlockSpec((1, 2, 8, _LANES), lambda p, i: (p, 0, 0, 0)),
            scratch_shapes=[pltpu.VMEM((2, 8, _LANES), jnp.float32)],
        ),
        compiler_params=pltpu.CompilerParams(
            dimension_semantics=("parallel", "arbitrary"),
            vmem_limit_bytes=_VMEM_LIMIT_BYTES),
    )(x2d, t2d)

    intersection = jnp.sum(partials[:, 0])
    total = jnp.sum(partials[:, 1])
    return intersection, total


@functools.partial(jax.jit, static_argnames=("smooth", "min_kernel_elements"))
def iou_loss(inputs, targets, smooth=1, min_kernel_elements=_SMALL_INPUT_THRESHOLD):
    n = inputs.size
    x = jnp.ravel(inputs)
    t = jnp.ravel(targets)
    rows = n // _LANES

    if n < min_kernel_elements or rows < 8:
        # Small-tensor fallback: a fused XLA reduction is faster than the
        # pallas_call launch + pipeline prologue.
        s = jax.nn.sigmoid(x.astype(jnp.float32))
        tf = t.astype(jnp.float32)
        intersection = jnp.sum(s * tf)
        total = jnp.sum(s + tf)
    else:
        rem = n % _LANES
        n_main = n - rem
        if rem:
            x_main = jax.lax.slice(x, (0,), (n_main,))
            t_main = jax.lax.slice(t, (0,), (n_main,))
        else:
            x_main, t_main = x, t
        x2d = x_main.reshape(rows, _LANES)
        t2d = t_main.reshape(rows, _LANES)
        intersection, total = _iou_partial_sums(x2d, t2d)
        if rem:
            # <=127-element tail handled with a tiny fused reduction.
            x_tail = jax.lax.slice(x, (n_main,), (n,)).astype(jnp.float32)
            t_tail = jax.lax.slice(t, (n_main,), (n,)).astype(jnp.float32)
            s_tail = jax.nn.sigmoid(x_tail)
            intersection = intersection + jnp.sum(s_tail * t_tail)
            total = total + jnp.sum(s_tail + t_tail)

    union = total - intersection
    iou = (intersection + smooth) / (union + smooth)
    return 1.0 - iou


def iou_loss_reference(inputs, targets, smooth=1):
    s = jax.nn.sigmoid(inputs.astype(jnp.float32)).ravel()
    t = targets.astype(jnp.float32).ravel()
    intersection = jnp.sum(s * t)
    total = jnp.sum(s + t)
    union = total - intersection
    return 1.0 - (intersection + smooth) / (union + smooth)


if __name__ == "__main__":
    key = jax.random.PRNGKey(0)
    k1, k2, k3, k4 = jax.random.split(key, 4)

    # NCHW logits and binary mask targets, as the PyTorch forward implies.
    x = jax.random.normal(k1, (2, 4, 16, 16), dtype=jnp.float32)
    t = (jax.random.uniform(k2, (2, 4, 16, 16)) > 0.5).astype(jnp.float32)

    # Force the Pallas path (the default threshold would route a tensor this
    # small to the pure-XLA fallback).
    loss = jax.block_until_ready(iou_loss(x, t, smooth=1, min_kernel_elements=0))
    ref = iou_loss_reference(x, t, smooth=1)
    assert jnp.allclose(loss, ref, atol=1e-5, rtol=1e-5), (loss, ref)

    # Ragged size (not a multiple of 128): exercises the multi-block grid, the
    # megacore split, the masked boundary block and the wrapper-side tail.
    xb = jax.random.normal(k3, (3, 5, 37, 41), dtype=jnp.float32)
    tb = (jax.random.uniform(k4, (3, 5, 37, 41)) > 0.5).astype(jnp.float32)
    lb = jax.block_until_ready(iou_loss(xb, tb, smooth=1, min_kernel_elements=0))
    rb = iou_loss_reference(xb, tb, smooth=1)
    assert jnp.allclose(lb, rb, atol=1e-5, rtol=1e-5), (lb, rb)

    print("KERNEL_OK")
</pallas_src>

<mosaic_0001>
module attributes {stable_mosaic.version = 11 : i64} {
  func.func @_iou_sums_kernel(%arg0: i32, %arg1: i32, %arg2: memref<16x128xf32, #tpu.memory_space<vmem>>, %arg3: memref<16x128xf32, #tpu.memory_space<vmem>>, %arg4: memref<1x2x8x128xf32, #tpu.memory_space<vmem>>, %arg5: memref<2x8x128xf32, #tpu.memory_space<vmem>>) attributes {dimension_semantics = [#tpu.dimension_semantics<parallel>, #tpu.dimension_semantics<arbitrary>], iteration_bounds = array<i64: 1, 1>, scalar_prefetch = 0 : i64, scratch_operands = 1 : i64, tpu.core_type = #tpu.core_type<tc>, window_params = [{transform_indices = @transform_0, window_bounds = array<i64: 16, 128>}, {transform_indices = @transform_1, window_bounds = array<i64: 16, 128>}, {transform_indices = @transform_2, window_bounds = array<i64: 1, 2, 8, 128>}]} {
    %c0_i32 = arith.constant 0 : i32
    %0 = arith.cmpi eq, %arg1, %c0_i32 : i32
    %1 = arith.extui %0 : i1 to i32
    %c0_i32_0 = arith.constant 0 : i32
    %2 = arith.cmpi ne, %1, %c0_i32_0 : i32
    scf.if %2 {
      %cst_21 = arith.constant 0.000000e+00 : f32
      %33 = vector.broadcast %cst_21 : f32 to vector<2x8x128xf32>
      %c0_22 = arith.constant 0 : index
      %c0_23 = arith.constant 0 : index
      %c0_24 = arith.constant 0 : index
      %34 = vector.load %arg5[%c0_22, %c0_23, %c0_24] : memref<2x8x128xf32, #tpu.memory_space<vmem>>, vector<2x8x128xf32>
      tpu.vector_store %arg5[%c0_22, %c0_23, %c0_24], %33 {strides = array<i32>} : memref<2x8x128xf32, #tpu.memory_space<vmem>>, vector<2x8x128xf32>,
    } else {
    }
    %c0 = arith.constant 0 : index
    %c0_1 = arith.constant 0 : index
    %3 = vector.load %arg2[%c0, %c0_1] : memref<16x128xf32, #tpu.memory_space<vmem>>, vector<16x128xf32>
    %c0_2 = arith.constant 0 : index
    %c0_3 = arith.constant 0 : index
    %4 = vector.load %arg3[%c0_2, %c0_3] : memref<16x128xf32, #tpu.memory_space<vmem>>, vector<16x128xf32>
    %cst = arith.constant 5.000000e-01 : f32
    %5 = vector.broadcast %cst : f32 to vector<16x128xf32>
    %6 = arith.mulf %5, %3 : vector<16x128xf32>
    %7 = math.tanh %6 : vector<16x128xf32>
    %cst_4 = arith.constant 1.000000e+00 : f32
    %8 = vector.broadcast %cst_4 : f32 to vector<16x128xf32>
    %9 = arith.addf %7, %8 : vector<16x128xf32>
    %cst_5 = arith.constant 5.000000e-01 : f32
    %10 = vector.broadcast %cst_5 : f32 to vector<16x128xf32>
    %11 = arith.mulf %10, %9 : vector<16x128xf32>
    %12 = arith.mulf %11, %4 : vector<16x128xf32>
    %13 = vector.shape_cast %12 : vector<16x128xf32> to vector<2x8x128xf32>
    %cst_6 = arith.constant dense<0.000000e+00> : vector<8x128xf32>
    %14 = vector.multi_reduction <add>, %13, %cst_6 [0] : vector<2x8x128xf32> to vector<8x128xf32>
    %15 = arith.addf %11, %4 : vector<16x128xf32>
    %16 = vector.shape_cast %15 : vector<16x128xf32> to vector<2x8x128xf32>
    %cst_7 = arith.constant dense<0.000000e+00> : vector<8x128xf32>
    %17 = vector.multi_reduction <add>, %16, %cst_7 [0] : vector<2x8x128xf32> to vector<8x128xf32>
    %c0_8 = arith.constant 0 : index
    %c0_9 = arith.constant 0 : index
    %c0_10 = arith.constant 0 : index
    %18 = vector.load %arg5[%c0_8, %c0_9, %c0_10] : memref<2x8x128xf32, #tpu.memory_space<vmem>>, vector<1x8x128xf32>
    %19 = vector.shape_cast %18 : vector<1x8x128xf32> to vector<8x128xf32>
    %20 = arith.addf %19, %14 : vector<8x128xf32>
    %c0_11 = arith.constant 0 : index
    %c0_12 = arith.constant 0 : index
    %c0_13 = arith.constant 0 : index
    %21 = vector.load %arg5[%c0_11, %c0_12, %c0_13] : memref<2x8x128xf32, #tpu.memory_space<vmem>>, vector<1x8x128xf32>
    %22 = vector.shape_cast %21 : vector<1x8x128xf32> to vector<8x128xf32>
    %23 = vector.shape_cast %20 : vector<8x128xf32> to vector<1x8x128xf32>
    tpu.vector_store %arg5[%c0_11, %c0_12, %c0_13], %23 {strides = array<i32>} : memref<2x8x128xf32, #tpu.memory_space<vmem>>, vector<1x8x128xf32>,
    %c1 = arith.constant 1 : index
    %c0_14 = arith.constant 0 : index
    %c0_15 = arith.constant 0 : index
    %24 = vector.load %arg5[%c1, %c0_14, %c0_15] : memref<2x8x128xf32, #tpu.memory_space<vmem>>, vector<1x8x128xf32>
    %25 = vector.shape_cast %24 : vector<1x8x128xf32> to vector<8x128xf32>
    %26 = arith.addf %25, %17 : vector<8x128xf32>
    %c1_16 = arith.constant 1 : index
    %c0_17 = arith.constant 0 : index
    %c0_18 = arith.constant 0 : index
    %27 = vector.load %arg5[%c1_16, %c0_17, %c0_18] : memref<2x8x128xf32, #tpu.memory_space<vmem>>, vector<1x8x128xf32>
    %28 = vector.shape_cast %27 : vector<1x8x128xf32> to vector<8x128xf32>
    %29 = vector.shape_cast %26 : vector<8x128xf32> to vector<1x8x128xf32>
    tpu.vector_store %arg5[%c1_16, %c0_17, %c0_18], %29 {strides = array<i32>} : memref<2x8x128xf32, #tpu.memory_space<vmem>>, vector<1x8x128xf32>,
    %c0_i32_19 = arith.constant 0 : i32
    %30 = arith.cmpi eq, %arg1, %c0_i32_19 : i32
    %31 = arith.extui %30 : i1 to i32
    %c0_i32_20 = arith.constant 0 : i32
    %32 = arith.cmpi ne, %31, %c0_i32_20 : i32
    scf.if %32 {
      %c0_21 = arith.constant 0 : index
      %c0_22 = arith.constant 0 : index
      %c0_23 = arith.constant 0 : index
      %33 = vector.load %arg5[%c0_21, %c0_22, %c0_23] : memref<2x8x128xf32, #tpu.memory_space<vmem>>, vector<2x8x128xf32>
      %c0_24 = arith.constant 0 : index
      %c0_25 = arith.constant 0 : index
      %c0_26 = arith.constant 0 : index
      %c0_27 = arith.constant 0 : index
      %34 = vector.load %arg4[%c0_24, %c0_25, %c0_26, %c0_27] : memref<1x2x8x128xf32, #tpu.memory_space<vmem>>, vector<1x2x8x128xf32>
      %35 = vector.shape_cast %34 : vector<1x2x8x128xf32> to vector<2x8x128xf32>
      %36 = vector.shape_cast %33 : vector<2x8x128xf32> to vector<1x2x8x128xf32>
      tpu.vector_store %arg4[%c0_24, %c0_25, %c0_26, %c0_27], %36 {strides = array<i32>} : memref<1x2x8x128xf32, #tpu.memory_space<vmem>>, vector<1x2x8x128xf32>,
    } else {
    }
    return
  }
  func.func @transform_0(%arg0: i32, %arg1: i32) -> (i32, i32) {
    %c1_i32 = arith.constant 1 : i32
    %0 = arith.muli %arg0, %c1_i32 : i32
    %1 = arith.addi %0, %arg1 : i32
    %c0_i32 = arith.constant 0 : i32
    %c0_i32_0 = arith.constant 0 : i32
    return %1, %c0_i32 : i32, i32
  }
  func.func @transform_1(%arg0: i32, %arg1: i32) -> (i32, i32) {
    %c1_i32 = arith.constant 1 : i32
    %0 = arith.muli %arg0, %c1_i32 : i32
    %1 = arith.addi %0, %arg1 : i32
    %c0_i32 = arith.constant 0 : i32
    %c0_i32_0 = arith.constant 0 : i32
    return %1, %c0_i32 : i32, i32
  }
  func.func @transform_2(%arg0: i32, %arg1: i32) -> (i32, i32, i32, i32) {
    %c0_i32 = arith.constant 0 : i32
    %c0_i32_0 = arith.constant 0 : i32
    %c0_i32_1 = arith.constant 0 : i32
    %c0_i32_2 = arith.constant 0 : i32
    return %arg0, %c0_i32, %c0_i32_0, %c0_i32_1 : i32, i32, i32, i32
  }
}

</mosaic_0001>

<llo_original>
// kernel: iou_loss.1
$region0: #{iou_loss.1}
  #allocation0 [shape = 'u32[]', space=smem, size = 0x4, offset = 0x4, fixed_abs, tag = 'smem constant byte address 0x4 - core index']
  #allocation1 [shape = 'u32[144,128]{1,0:T(1,128)}', space=vmem, size = 0x12000, scoped, tag = 'internal scratch']
  #allocation2 [shape = 'f32[2,8,128]{2,1,0:T(8,128)}', space=vmem, size = 0x2000, scoped, tag = 'scratch operand']
  %s0 = inlined_call_operand.vmem [shape: f32[16,128], index: 0, kind: input, shape index: {}]
  %s1 = inlined_call_operand.vmem [shape: f32[16,128], index: 1, kind: input, shape index: {}]
  %s2 = inlined_call_operand.vmem [shape: f32[1,2,8,128], index: 2, kind: output, shape index: {}]
  %s3 = sld [smem:[#allocation0]]
  $region26: #{iou_loss.1} parent=0
    _
  %s5 = ssub.s32 1, %s3
  %s6 = scalar_select 0, %s5, %s3
  // Predicated region
  $region2: #{iou_loss.1} parent=0 // pred_check
    _
  $region3: #{iou_loss.1} parent=0 // pred_check_branch
    %8 = sbr.rel (0) target = $region5
  $region4: #{iou_loss.1} parent=0 // pred_region
    %s9 = sadd.s32 0, 0
    %s10 = smul.u32 2, %s9
    %p11 = scmp.lt.s32.totalorder %s10, 1
    %s12 = scalar_select %p11, %s10, 1
    %s13 = smul.addr %s12, 8
    %s14 = scalar_lea.vmem %s0, %s13
    %s15 = sadd.s32 0, 0
    %s16 = smul.u32 2, %s15
  $region5: #{iou_loss.1} parent=0 // pred_fallthru
    _
  // Predicated region
  $region6: #{iou_loss.1} parent=0 // pred_check
    _
  $region7: #{iou_loss.1} parent=0 // pred_check_branch
    %18 = sbr.rel (0) target = $region9
  $region8: #{iou_loss.1} parent=0 // pred_region
    %s19 = sadd.s32 0, 0
    %s20 = smul.u32 2, %s19
    %p21 = scmp.lt.s32.totalorder %s20, 1
    %s22 = scalar_select %p21, %s20, 1
    %s23 = smul.addr %s22, 8
    %s24 = scalar_lea.vmem %s1, %s23
    %s25 = sadd.s32 0, 0
    %s26 = smul.u32 2, %s25
  $region9: #{iou_loss.1} parent=0 // pred_fallthru
    _
  %s27 = sadd.s32 0, 0
  %s28 = smul.u32 2, %s27
  %p29 = scmp.lt.s32.totalorder %s28, 1
  %s30 = scalar_select %p29, %s28, 1
  %s31 = smul.addr %s30, 8
  %s32 = scalar_lea.vmem %s0, %s31
  %s33 = sadd.s32 0, 0
  %s34 = smul.u32 2, %s33
  %p35 = scmp.lt.s32.totalorder %s34, 1
  %s36 = scalar_select %p35, %s34, 1
  %s37 = smul.addr %s36, 8
  %s38 = scalar_lea.vmem %s1, %s37
  %s39 = sadd.s32 0, 0
  %s40 = smul.u32 2, %s39
  %p41 = scmp.lt.s32.totalorder %s40, 1
  %s42 = scalar_select %p41, %s40, 1
  %s43 = smul.addr %s42, 8
  %s44 = scalar_lea.vmem %s0, %s43
  %s45 = sadd.s32 0, 0
  %s46 = smul.u32 2, %s45
  %s47 = sadd.s32 0, 0
  %s48 = smul.u32 2, %s47
  %p49 = scmp.lt.s32.totalorder %s48, 1
  %s50 = scalar_select %p49, %s48, 1
  %s51 = smul.addr %s50, 8
  %s52 = scalar_lea.vmem %s1, %s51
  %s53 = sadd.s32 0, 0
  %s54 = smul.u32 2, %s53
  %p55 = scmp.eq.s32.totalorder 0, 0
  // Predicated region
  $region10: #{iou_loss.1} parent=0 // pred_check
    %p56 = pneg %p55
  $region11: #{iou_loss.1} parent=0 // pred_check_branch
    %58 = sbr.rel (%p56) target = $region13
  $region12: #{iou_loss.1} parent=0 // pred_region
    %59 = vst [vmem:[#allocation2] sm:$0xff] 0.0
    %60 = vst [vmem:[#allocation2 + $0x8] sm:$0xff] 0.0
  $region13: #{iou_loss.1} parent=0 // pred_fallthru
    _
  %v61 = vld [vmem:[%s44] sm:$0xff]
  %v62 = vld [vmem:[%s44 + $0x8] sm:$0xff]
  %v63 = vld [vmem:[%s52] sm:$0xff]
  %v64 = vld [vmem:[%s52 + $0x8] sm:$0xff]
  %v65 = vmul.f32 %v61, 0.5
  %v66 = vmul.f32 %v62, 0.5
  %v67 = vtanh.pop %v65
  %v68 = vtanh.pop %v66
  %v69 = vadd.f32 %v67, 1.0
  %v70 = vadd.f32 %v68, 1.0
  %v71 = vmul.f32 %v69, 0.5
  %v72 = vmul.f32 %v70, 0.5
  %v73 = vmul.f32 %v71, %v63
  %v74 = vmul.f32 %v72, %v64
  %v75 = vadd.f32 %v73, %v74
  %v76 = vadd.f32 %v71, %v63
  %v77 = vadd.f32 %v72, %v64
  %v78 = vadd.f32 %v76, %v77
  %v79 = vld [vmem:[#allocation2] sm:$0xff]
  %v80 = vadd.f32 %v79, %v75
  %81 = vst [vmem:[#allocation2] sm:$0xff] %v80
  %s82 = scalar_lea.vmem [#allocation2], 8
  %v83 = vld [vmem:[%s82] sm:$0xff]
  %v84 = vadd.f32 %v83, %v78
  %85 = vst [vmem:[%s82] sm:$0xff] %v84
  // Predicated region
  $region14: #{iou_loss.1} parent=0 // pred_check
    %p86 = pneg %p55
  $region15: #{iou_loss.1} parent=0 // pred_check_branch
    %88 = sbr.rel (%p86) target = $region17
  $region16: #{iou_loss.1} parent=0 // pred_region
    %v89 = vld [vmem:[#allocation2] sm:$0xff]
    %v90 = vld [vmem:[#allocation2 + $0x8] sm:$0xff]
    %91 = vst [vmem:[%s2] sm:$0xff] %v89
    %92 = vst [vmem:[%s2 + $0x8] sm:$0xff] %v90
  $region17: #{iou_loss.1} parent=0 // pred_fallthru
    _
  // Predicated region
  $region18: #{iou_loss.1} parent=0 // pred_check
    _
  $region19: #{iou_loss.1} parent=0 // pred_check_branch
    %94 = sbr.rel (0) target = $region21
  $region20: #{iou_loss.1} parent=0 // pred_region
    _
  $region21: #{iou_loss.1} parent=0 // pred_fallthru
    _
  // Predicated region
  $region22: #{iou_loss.1} parent=0 // pred_check
    _
  $region23: #{iou_loss.1} parent=0 // pred_check_branch
    %96 = sbr.rel (0) target = $region25
  $region24: #{iou_loss.1} parent=0 // pred_region
    _
  $region25: #{iou_loss.1} parent=0 // pred_fallthru
    _

</llo_original>
